<compile_context>
chip_gen: v7x
topology: tpu7x:2x2x1
jax: 0.10.0
libtpu: 0.0.40
codegen_flags: <defaults>
</compile_context>

<pallas_src>
import jax
import jax.numpy as jnp
import numpy as np
from jax.experimental import pallas as pl
from jax.experimental.pallas import tpu as pltpu


# ------------------------------- Pallas kernel ------------------------------ #

def _posenc_kernel(x_ref, pos_ref, o_ref):
    # x_ref/o_ref: [ta0, ts, td]; pos_ref: [ts, td] (table tile, cast in-kernel, free
    # on the VPU for a memory-bound add).  Broadcast add over the leading axis.
    o_ref[...] = x_ref[...] + pos_ref[...].astype(o_ref.dtype)


# ------------------------------ tile selection ------------------------------ #

def _largest_divisor(dim, cap, align):
    """Largest t with t % align == 0, dim % t == 0, align <= t <= min(dim, cap); None if none."""
    cap = min(dim, cap)
    t = (cap // align) * align
    while t >= align:
        if dim % t == 0:
            return t
        t -= align
    return None


def _choose_tiles(A0, A1, D, x_itemsize, pos_itemsize):
    # dtype-dependent sublane alignment keeps stores unmasked (f32:8, bf16:16, int8:32).
    sub_align = max(8, 32 // x_itemsize)

    # Lane tile: keep the last dim lane-dense (multiple of 128) or take the full dim.
    if D % 128 == 0:
        td = _largest_divisor(D, 4096, 128) or D
    else:
        td = D

    # VMEM-budget-driven rows per block.  Per grid step the pipeline holds
    #   2 * (x block + out block) + 2 * pos block  bytes (double-buffered).
    # A 24 MiB budget stays comfortably under the 32 MiB scoped limit we request,
    # which itself fits every generation (v7x physical VMEM is only 64 MiB).
    budget = 24 * 1024 * 1024
    per_row = 2 * td * (2 * x_itemsize + pos_itemsize)   # conservative (ta0 >= 1)
    max_rows = max(sub_align, budget // per_row)

    # Fold the broadcast axis A0 first: the pos tile is then loaded once and reused
    # across all A0 rows instead of being re-DMA'd per A0 grid step.
    ta0 = _largest_divisor(A0, max(1, max_rows // sub_align), 1) or 1
    ts = (_largest_divisor(A1, max_rows // ta0, sub_align)
          or _largest_divisor(A1, max_rows // ta0, 8)
          or A1)
    # TODO(synk): for pathological A1 (large prime) the full-dim fallback above can
    # exceed the VMEM budget; a padded/BoundedSlice strategy would be needed there.
    return ta0, ts, td


# --------------------------------- wrapper ----------------------------------- #

def positional_encoding(x, pos_table):
    """out[a0, a1, :] = x[a0, a1, :] + pos_table[a1, :]   (dropout = identity, eval mode)."""
    A0, A1, D = x.shape
    max_len, Dp = pos_table.shape
    if A1 > max_len:
        raise ValueError("axis-1 length exceeds positional table max_len")
    if Dp != D:
        raise ValueError("d_model mismatch between inputs and positional table")

    ta0, ts, td = _choose_tiles(A0, A1, D, x.dtype.itemsize, pos_table.dtype.itemsize)
    n_a, n_s, n_d = A0 // ta0, A1 // ts, D // td

    # Grid layout:
    #  * A0 (only if it had to be tiled) is innermost -> pos block index unchanged
    #    across consecutive steps, Pallas skips the re-fetch.
    #  * larger of the remaining extents goes outermost for the v7x megacore split.
    axes = ["s", "d"] if n_s >= n_d else ["d", "s"]
    if n_a > 1:
        axes.append("a")
    extents = {"a": n_a, "s": n_s, "d": n_d}
    grid = tuple(extents[name] for name in axes)
    pos_of = {name: i for i, name in enumerate(axes)}

    def _bi(gidx, name):
        return gidx[pos_of[name]] if name in pos_of else 0

    def x_index_map(*gidx):
        return (_bi(gidx, "a"), _bi(gidx, "s"), _bi(gidx, "d"))

    def pos_index_map(*gidx):
        return (_bi(gidx, "s"), _bi(gidx, "d"))

    # The full (unsliced, uncast) table goes straight in: the BlockSpec only ever DMAs
    # the first A1 rows, and the cast to x.dtype happens inside the kernel.
    return pl.pallas_call(
        _posenc_kernel,
        out_shape=jax.ShapeDtypeStruct((A0, A1, D), x.dtype),
        grid=grid,
        in_specs=[
            pl.BlockSpec((ta0, ts, td), x_index_map),
            pl.BlockSpec((ts, td), pos_index_map),
        ],
        out_specs=pl.BlockSpec((ta0, ts, td), x_index_map),
        # Mirror the PyTorch in-place "+=": output aliases the input buffer.
        input_output_aliases={0: 0},
        compiler_params=pltpu.CompilerParams(
            dimension_semantics=("parallel",) * len(grid),
            vmem_limit_bytes=32 * 1024 * 1024,
        ),
    )(x, pos_table)


# --------------------------- positional table (host) ------------------------ #

def make_pos_table(max_len, d_model):
    """Numerically faithful to the reference numpy construction: row 0 is all zeros
    (both even and odd columns -- the reference uses np.zeros for pos==0 and applies
    sin/cos only to rows 1:), sin on even columns, cos on odd columns elsewhere."""
    pos = np.arange(max_len, dtype=np.float64)[:, None]
    i = np.arange(d_model, dtype=np.float64)[None, :]
    table = pos / np.power(10000.0, 2.0 * i / d_model)
    table[0, :] = 0.0
    table[1:, 0::2] = np.sin(table[1:, 0::2])
    table[1:, 1::2] = np.cos(table[1:, 1::2])
    return jnp.asarray(table, dtype=jnp.float32)


# TODO(synk): nn.Dropout(p=0.1) is treated as identity (inference / eval mode); the
# training-mode stochastic mask is not implemented.


# ---------------------------------- main ------------------------------------ #

if __name__ == "__main__":
    key = jax.random.PRNGKey(0)
    D_MODEL = 512
    MAX_LEN = 64
    A0, A1 = 2, 16            # axis 0 (broadcast) and axis 1 (position) of `inputs`

    pos_table = make_pos_table(MAX_LEN, D_MODEL)
    fwd = jax.jit(positional_encoding)

    # f32 path
    x = jax.random.normal(jax.random.fold_in(key, 1), (A0, A1, D_MODEL), jnp.float32)
    out = fwd(x, pos_table)
    jax.block_until_ready(out)
    ref = x + pos_table[:A1][None, :, :]
    assert out.shape == x.shape and out.dtype == x.dtype
    assert bool(jnp.all(jnp.isfinite(out)))
    np.testing.assert_allclose(np.asarray(out), np.asarray(ref), atol=1e-6, rtol=1e-6)

    # bf16 path (dtype-dependent sublane tiling + in-kernel cast)
    xb = x.astype(jnp.bfloat16)
    outb = fwd(xb, pos_table)
    jax.block_until_ready(outb)
    refb = np.asarray(xb, np.float32) + np.asarray(pos_table[:A1], np.float32)[None, :, :]
    np.testing.assert_allclose(np.asarray(outb, np.float32), refb, atol=0.05, rtol=0.05)

    print("KERNEL_OK")
</pallas_src>

<mosaic_0001>
module attributes {stable_mosaic.version = 11 : i64} {
  func.func @_posenc_kernel(%arg0: i32, %arg1: i32, %arg2: memref<2x16x512xf32, #tpu.memory_space<vmem>>, %arg3: memref<16x512xf32, #tpu.memory_space<vmem>>, %arg4: memref<2x16x512xf32, #tpu.memory_space<vmem>>) attributes {dimension_semantics = [#tpu.dimension_semantics<parallel>, #tpu.dimension_semantics<parallel>], iteration_bounds = array<i64: 1, 1>, scalar_prefetch = 0 : i64, scratch_operands = 0 : i64, tpu.core_type = #tpu.core_type<tc>, window_params = [{transform_indices = @transform_0, window_bounds = array<i64: 2, 16, 512>}, {transform_indices = @transform_1, window_bounds = array<i64: 16, 512>}, {transform_indices = @transform_2, window_bounds = array<i64: 2, 16, 512>}]} {
    %c0 = arith.constant 0 : index
    %c0_0 = arith.constant 0 : index
    %c0_1 = arith.constant 0 : index
    %0 = vector.load %arg2[%c0, %c0_0, %c0_1] : memref<2x16x512xf32, #tpu.memory_space<vmem>>, vector<2x16x512xf32>
    %c0_2 = arith.constant 0 : index
    %c0_3 = arith.constant 0 : index
    %1 = vector.load %arg3[%c0_2, %c0_3] : memref<16x512xf32, #tpu.memory_space<vmem>>, vector<16x512xf32>
    %2 = vector.shape_cast %1 : vector<16x512xf32> to vector<1x16x512xf32>
    %3 = vector.broadcast %2 : vector<1x16x512xf32> to vector<2x16x512xf32>
    %4 = arith.addf %0, %3 : vector<2x16x512xf32>
    %c0_4 = arith.constant 0 : index
    %c0_5 = arith.constant 0 : index
    %c0_6 = arith.constant 0 : index
    %5 = vector.load %arg4[%c0_4, %c0_5, %c0_6] : memref<2x16x512xf32, #tpu.memory_space<vmem>>, vector<2x16x512xf32>
    tpu.vector_store %arg4[%c0_4, %c0_5, %c0_6], %4 {strides = array<i32>} : memref<2x16x512xf32, #tpu.memory_space<vmem>>, vector<2x16x512xf32>,
    return
  }
  func.func @transform_0(%arg0: i32, %arg1: i32) -> (i32, i32, i32) {
    %c0_i32 = arith.constant 0 : i32
    %c0_i32_0 = arith.constant 0 : i32
    return %c0_i32, %arg0, %arg1 : i32, i32, i32
  }
  func.func @transform_1(%arg0: i32, %arg1: i32) -> (i32, i32) {
    %c0_i32 = arith.constant 0 : i32
    return %arg0, %arg1 : i32, i32
  }
  func.func @transform_2(%arg0: i32, %arg1: i32) -> (i32, i32, i32) {
    %c0_i32 = arith.constant 0 : i32
    %c0_i32_0 = arith.constant 0 : i32
    return %c0_i32, %arg0, %arg1 : i32, i32, i32
  }
}

</mosaic_0001>

<llo_original>
// kernel: positional_encoding.1
$region0: #{positional_encoding.1}
  #allocation0 [shape = 'u32[]', space=smem, size = 0x4, offset = 0x4, fixed_abs, tag = 'smem constant byte address 0x4 - core index']
  #allocation1 [shape = 'u32[144,128]{1,0:T(1,128)}', space=vmem, size = 0x12000, scoped, tag = 'internal scratch']
  %s0 = inlined_call_operand.hbm [shape: f32[2,16,512], index: 0, kind: input, shape index: {}, may-alias: {0,2}]
  %s1 = inlined_call_operand.vmem [shape: f32[64,512], index: 1, kind: input, shape index: {}]
  %s2 = inlined_call_operand.hbm [shape: f32[2,16,512], index: 2, kind: output, shape index: {}, may-alias: {0,2}]
  %s3 = sld [smem:[#allocation0]]
  $region22: #{positional_encoding.1} parent=0
    _
  %s5 = ssub.s32 1, %s3
  %s6 = scalar_select 0, %s5, %s3
  $region1: #{positional_encoding.1} parent=0
    #allocation2 [shape = 'u8[65536]{0}', space=vmem, size = 0x10000, scoped, tag = 'input window, operand 0, single buffered']
    #allocation3 [shape = 's32[1]{0}', space=sflag, size = 0x4, scoped, tag = 'scoped memory for positional_encoding.1']
    #allocation4 [shape = 's32[1]{0}', space=sflag, size = 0x4, scoped, tag = 'scoped memory for positional_encoding.1']
    #allocation5 [shape = 'u8[65536]{0}', space=vmem, size = 0x10000, scoped, tag = 'output window, operand 0, single buffered']
    %7 = vsyncpa [#allocation3], 0
    %8 = vsyncpa [#allocation4], 0
    // Predicated region
    $region2: #{positional_encoding.1} parent=1 // pred_check
      _
    $region3: #{positional_encoding.1} parent=1 // pred_check_branch
      %10 = sbr.rel (0) target = $region5
    $region4: #{positional_encoding.1} parent=1 // pred_region
      %s12 = ssub.s32 2048, 2048
      %13 = vsyncadd [#allocation3], %s12
      %s14 = sshll.u32 [#allocation2], 4
      %s15 = int_to_ptr.vmem [resolvable:$true] %s14
      %20 = dma.hbm_to_vmem [thread:$0]  %s0, 2048, %s15, [#allocation3], 512, 512, 32
    $region5: #{positional_encoding.1} parent=1 // pred_fallthru
      _
    // Predicated region
    $region6: #{positional_encoding.1} parent=1 // pred_check
      _
    $region7: #{positional_encoding.1} parent=1 // pred_check_branch
      %22 = sbr.rel (0) target = $region9
    $region8: #{positional_encoding.1} parent=1 // pred_region
      _
    $region9: #{positional_encoding.1} parent=1 // pred_fallthru
      _
    // Predicated region
    $region10: #{positional_encoding.1} parent=1 // pred_check
      _
    $region11: #{positional_encoding.1} parent=1 // pred_check_branch
      %24 = sbr.rel (0) target = $region13
    $region12: #{positional_encoding.1} parent=1 // pred_region
      %25 = dma.done [#allocation3], 2048
    $region13: #{positional_encoding.1} parent=1 // pred_fallthru
      _
    %v26 = vld [vmem:[#allocation2] sm:$0xff]
    %v27 = vld [vmem:[#allocation2 + $0x8] sm:$0xff]
    %v28 = vld [vmem:[#allocation2 + $0x10] sm:$0xff]
    %v29 = vld [vmem:[#allocation2 + $0x18] sm:$0xff]
    %v30 = vld [vmem:[#allocation2 + $0x20] sm:$0xff]
    %v31 = vld [vmem:[#allocation2 + $0x28] sm:$0xff]
    %v32 = vld [vmem:[#allocation2 + $0x30] sm:$0xff]
    %v33 = vld [vmem:[#allocation2 + $0x38] sm:$0xff]
    %v34 = vld [vmem:[#allocation2 + $0x40] sm:$0xff]
    %v35 = vld [vmem:[#allocation2 + $0x48] sm:$0xff]
    %v36 = vld [vmem:[#allocation2 + $0x50] sm:$0xff]
    %v37 = vld [vmem:[#allocation2 + $0x58] sm:$0xff]
    %v38 = vld [vmem:[#allocation2 + $0x60] sm:$0xff]
    %v39 = vld [vmem:[#allocation2 + $0x68] sm:$0xff]
    %v40 = vld [vmem:[#allocation2 + $0x70] sm:$0xff]
    %v41 = vld [vmem:[#allocation2 + $0x78] sm:$0xff]
    %v42 = vld [vmem:[%s1] sm:$0xff]
    %v43 = vld [vmem:[%s1 + $0x8] sm:$0xff]
    %v44 = vld [vmem:[%s1 + $0x10] sm:$0xff]
    %v45 = vld [vmem:[%s1 + $0x18] sm:$0xff]
    %v46 = vld [vmem:[%s1 + $0x20] sm:$0xff]
    %v47 = vld [vmem:[%s1 + $0x28] sm:$0xff]
    %v48 = vld [vmem:[%s1 + $0x30] sm:$0xff]
    %v49 = vld [vmem:[%s1 + $0x38] sm:$0xff]
    %v50 = vadd.f32 %v26, %v42
    %v51 = vadd.f32 %v27, %v43
    %v52 = vadd.f32 %v28, %v44
    %v53 = vadd.f32 %v29, %v45
    %v54 = vadd.f32 %v30, %v46
    %v55 = vadd.f32 %v31, %v47
    %v56 = vadd.f32 %v32, %v48
    %v57 = vadd.f32 %v33, %v49
    %v58 = vadd.f32 %v34, %v42
    %v59 = vadd.f32 %v35, %v43
    %v60 = vadd.f32 %v36, %v44
    %v61 = vadd.f32 %v37, %v45
    %v62 = vadd.f32 %v38, %v46
    %v63 = vadd.f32 %v39, %v47
    %v64 = vadd.f32 %v40, %v48
    %v65 = vadd.f32 %v41, %v49
    %66 = vst [vmem:[#allocation5] sm:$0xff] %v50
    %67 = vst [vmem:[#allocation5 + $0x8] sm:$0xff] %v51
    %68 = vst [vmem:[#allocation5 + $0x10] sm:$0xff] %v52
    %69 = vst [vmem:[#allocation5 + $0x18] sm:$0xff] %v53
    %70 = vst [vmem:[#allocation5 + $0x20] sm:$0xff] %v54
    %71 = vst [vmem:[#allocation5 + $0x28] sm:$0xff] %v55
    %72 = vst [vmem:[#allocation5 + $0x30] sm:$0xff] %v56
    %73 = vst [vmem:[#allocation5 + $0x38] sm:$0xff] %v57
    %74 = vst [vmem:[#allocation5 + $0x40] sm:$0xff] %v58
    %75 = vst [vmem:[#allocation5 + $0x48] sm:$0xff] %v59
    %76 = vst [vmem:[#allocation5 + $0x50] sm:$0xff] %v60
    %77 = vst [vmem:[#allocation5 + $0x58] sm:$0xff] %v61
    %78 = vst [vmem:[#allocation5 + $0x60] sm:$0xff] %v62
    %79 = vst [vmem:[#allocation5 + $0x68] sm:$0xff] %v63
    %80 = vst [vmem:[#allocation5 + $0x70] sm:$0xff] %v64
    %81 = vst [vmem:[#allocation5 + $0x78] sm:$0xff] %v65
    // Predicated region
    $region14: #{positional_encoding.1} parent=1 // pred_check
      _
    $region15: #{positional_encoding.1} parent=1 // pred_check_branch
      %83 = sbr.rel (0) target = $region17
    $region16: #{positional_encoding.1} parent=1 // pred_region
      %s85 = ssub.s32 2048, 2048
      %86 = vsyncadd [#allocation4], %s85
      %s87 = sshll.u32 [#allocation5], 4
      %s88 = int_to_ptr.vmem [resolvable:$true] %s87
      %93 = dma.vmem_to_hbm [thread:$0]  %s88, 2048, %s2, [#allocation4], 512, 512, 32
    $region17: #{positional_encoding.1} parent=1 // pred_fallthru
      _
    // Predicated region
    $region18: #{positional_encoding.1} parent=1 // pred_check
      _
    $region19: #{positional_encoding.1} parent=1 // pred_check_branch
      %95 = sbr.rel (0) target = $region21
    $region20: #{positional_encoding.1} parent=1 // pred_region
      %96 = dma.done [#allocation4], 2048
    $region21: #{positional_encoding.1} parent=1 // pred_fallthru
      _
    %97 = vsyncpa [#allocation3], 1
    %98 = vsyncpa [#allocation4], 1

</llo_original>
